<compile_context>
chip_gen: v5e
topology: v5e:2x2
jax: 0.10.0
libtpu: 0.0.40
codegen_flags: <defaults>
</compile_context>

<pallas_src>
import math
import functools

import jax
import jax.numpy as jnp
from jax.experimental import pallas as pl
from jax.experimental.pallas import tpu as pltpu


_LANES = 128
_MIB = 1024 * 1024


def _gp_partial_kernel(g_ref, partial_ref, *, tile_r, valid_rows,
                       blocks_per_chunk, last_block, ragged_last, has_phantom):
    """Square + sublane-reduce one (N, tile_r, 128) block of the gradient.

    g_ref:       (N, tile_r, 128) input block, native dtype
    partial_ref: (1, N, 128) f32 per-chunk partial sums; resident across the
                 sequential k axis (same output block index), so we accumulate
                 into it directly -- no block-sized scratch.
    """
    p = pl.program_id(0)   # parallel chunk axis (multi-TC split)
    k = pl.program_id(1)   # sequential reduction axis within the chunk

    @pl.when(k == 0)
    def _():
        partial_ref[...] = jnp.zeros_like(partial_ref)

    g = g_ref[...].astype(jnp.float32)
    gsq = g * g
    logical_block = p * blocks_per_chunk + k

    if ragged_last:
        # Common path: full blocks, plain square-reduce-accumulate.
        @pl.when(logical_block < last_block)
        def _():
            partial_ref[...] += jnp.sum(gsq, axis=1)[None, :, :]

        # Mask work only runs for the single ragged trailing block.
        @pl.when(logical_block == last_block)
        def _():
            row = last_block * tile_r + jax.lax.broadcasted_iota(
                jnp.int32, gsq.shape, dimension=1)
            partial_ref[...] += jnp.sum(
                jnp.where(row < valid_rows, gsq, 0.0), axis=1)[None, :, :]
        # Phantom blocks (logical_block > last_block) accumulate nothing.
    elif has_phantom:
        @pl.when(logical_block <= last_block)
        def _():
            partial_ref[...] += jnp.sum(gsq, axis=1)[None, :, :]
    else:
        partial_ref[...] += jnp.sum(gsq, axis=1)[None, :, :]


def _gp_forward(grad_interp, block_bytes, tile_rows, num_chunks):
    """Returns (loss, per-sample 2-norm); heavy reduction in Pallas."""
    n = grad_interp.shape[0]
    d = math.prod(grad_interp.shape[1:])
    itemsize = jnp.dtype(grad_interp.dtype).itemsize

    # Lane-dense view (N, D) -> (N, R, 128).  No dtype cast; no copy when D is
    # already a multiple of 128 (contiguous reshape only).
    if d % _LANES != 0:
        pad = (-d) % _LANES                       # zeros don't change sum of squares
        g = jnp.pad(grad_interp.reshape(n, d), ((0, 0), (0, pad)))
        d_pad = d + pad
    else:
        g = grad_interp
        d_pad = d
    r = d_pad // _LANES
    g = g.reshape(n, r, _LANES)

    # Dtype-aware sublane multiple: 8 for f32, 16 for bf16, 32 for int8/fp8.
    sub_mult = max(8, 32 // itemsize)
    bytes_per_row = n * _LANES * itemsize         # HBM bytes per unit of tile_r
    if tile_rows is None:
        tile_cap = (block_bytes // bytes_per_row) // sub_mult * sub_mult
    else:
        tile_cap = (tile_rows // sub_mult) * sub_mult
    # Keep the 2x double-buffered input comfortably inside the VMEM budget.
    max_in_block = 20 * _MIB
    tile_cap = min(tile_cap, (max_in_block // bytes_per_row) // sub_mult * sub_mult)
    tile_cap = max(sub_mult, tile_cap)

    if r <= tile_cap:
        tile_r, grid_r = r, 1         # block dim == full array dim is always legal
    else:
        tile_r, grid_r = tile_cap, pl.cdiv(r, tile_cap)

    # Split the row-block axis across TensorCores only when there is work to
    # split; on single-TC chips this stays at 1 (no phantom blocks, no extra
    # partials buffer, no extra re-init).
    n_chunks = max(1, min(num_chunks, grid_r))
    bpc = pl.cdiv(grid_r, n_chunks)               # blocks per chunk (balanced)
    last_block = grid_r - 1
    has_phantom = n_chunks * bpc > grid_r         # at most n_chunks - 1 blocks
    ragged_last = grid_r * tile_r != r

    if has_phantom:
        # Clamp the DMA of phantom trailing blocks onto the last real block;
        # their accumulation is skipped in-kernel.
        def in_map(p, k):
            return (0, jnp.minimum(p * bpc + k, last_block), 0)
    else:
        def in_map(p, k):
            return (0, p * bpc + k, 0)

    kernel = functools.partial(
        _gp_partial_kernel, tile_r=tile_r, valid_rows=r,
        blocks_per_chunk=bpc, last_block=last_block,
        ragged_last=ragged_last, has_phantom=has_phantom)

    # Explicit VMEM budget: double-buffered input + resident output + margin.
    in_block_bytes = n * tile_r * _LANES * itemsize
    out_block_bytes = n * _LANES * 4
    vmem_needed = 2 * in_block_bytes + 2 * out_block_bytes + 2 * _MIB
    vmem_limit = int(min(max(32 * _MIB, vmem_needed), 48 * _MIB))

    cost = pl.CostEstimate(
        flops=2 * n * d_pad,
        transcendentals=0,
        bytes_accessed=n * d_pad * itemsize + n_chunks * n * _LANES * 4,
    )

    partials = pl.pallas_call(
        kernel,
        out_shape=jax.ShapeDtypeStruct((n_chunks, n, _LANES), jnp.float32),
        grid_spec=pltpu.PrefetchScalarGridSpec(
            num_scalar_prefetch=0,
            grid=(n_chunks, bpc),
            in_specs=[pl.BlockSpec((n, tile_r, _LANES), in_map)],
            out_specs=pl.BlockSpec((1, n, _LANES), lambda p, k: (p, 0, 0)),
        ),
        compiler_params=pltpu.CompilerParams(
            dimension_semantics=("parallel", "arbitrary"),
            vmem_limit_bytes=vmem_limit,
        ),
        cost_estimate=cost,
    )(g)

    # Tiny epilogue on (n_chunks, N, 128): cross-chunk + cross-lane combine.
    sumsq = jnp.sum(partials, axis=(0, 2))                # (N,)
    norm = jnp.sqrt(sumsq)
    loss = jnp.mean((norm - 1.0) ** 2)
    return loss, norm


@functools.partial(jax.custom_vjp, nondiff_argnums=(1, 2, 3))
def _gp_penalty(grad_interp, block_bytes, tile_rows, num_chunks):
    loss, _ = _gp_forward(grad_interp, block_bytes, tile_rows, num_chunks)
    return loss


def _gp_penalty_fwd(grad_interp, block_bytes, tile_rows, num_chunks):
    loss, norm = _gp_forward(grad_interp, block_bytes, tile_rows, num_chunks)
    return loss, (grad_interp, norm)


def _gp_penalty_bwd(block_bytes, tile_rows, num_chunks, res, ct):
    grad_interp, norm = res
    n = grad_interp.shape[0]
    safe = jnp.maximum(norm, 1e-12)                       # guard sqrt(0) gradient
    scale = ct * (2.0 / n) * (1.0 - 1.0 / safe)           # (N,)
    scale = scale.reshape((n,) + (1,) * (grad_interp.ndim - 1))
    dgrad = (scale * grad_interp.astype(jnp.float32)).astype(grad_interp.dtype)
    return (dgrad,)


_gp_penalty.defvjp(_gp_penalty_fwd, _gp_penalty_bwd)


def _default_num_chunks():
    # Two chunks only where the chip has two TensorCores to shard across.
    try:
        kind = jax.devices()[0].device_kind.lower()
    except Exception:
        return 1
    if "v7" in kind or "v4" in kind or "v5p" in kind:
        return 2
    return 1


def gradient_penalty_from_grad(grad_interp, *, block_bytes=8 * _MIB,
                               tile_rows=None, num_chunks=None):
    """mean((||grad.reshape(N,-1)||_2 - 1)^2); differentiable (custom VJP)."""
    if num_chunks is None:
        num_chunks = _default_num_chunks()
    return _gp_penalty(grad_interp, int(block_bytes),
                       tile_rows if tile_rows is None else int(tile_rows),
                       int(num_chunks))


def gradient_penalty_loss(interp, critic_fn):
    """JAX/Pallas equivalent of GradientPenaltyLoss.forward(interp, interp_crit)
    with interp_crit = critic_fn(interp)."""
    # TODO(synk): torch.autograd.grad has no in-kernel Pallas equivalent; the
    # VJP with a ones cotangent (== get_grad_outputs) is plain JAX autodiff,
    # only the norm/penalty reduction runs in the Pallas kernel.
    interp_crit, vjp_fn = jax.vjp(critic_fn, interp)
    grad_outputs = jnp.ones_like(interp_crit)             # ones-filled grad_outputs
    (grad_interp,) = vjp_fn(grad_outputs)
    return gradient_penalty_from_grad(grad_interp)


if __name__ == "__main__":
    key = jax.random.PRNGKey(0)
    k_x, k_w, k_g1, k_g2, k_g3 = jax.random.split(key, 5)

    def ref_penalty(grad):
        nn = grad.shape[0]
        return jnp.mean((jnp.linalg.norm(grad.reshape(nn, -1), axis=1) - 1.0) ** 2)

    # --- Test 1: full module semantics on (2, 4, 16, 16) ---------------------
    N, C, H, W = 2, 4, 16, 16
    interp = jax.random.normal(k_x, (N, C, H, W), dtype=jnp.float32)
    w_crit = jax.random.normal(k_w, (C,), dtype=jnp.float32) * 0.1

    def critic_fn(x):  # (N, C, H, W) -> (N,)
        return jnp.mean(jnp.tanh(x * w_crit[None, :, None, None]), axis=(1, 2, 3))

    loss = jax.jit(lambda x: gradient_penalty_loss(x, critic_fn))(interp)
    loss = jax.block_until_ready(loss)

    _, vjp_fn = jax.vjp(critic_fn, interp)
    (g_ref,) = vjp_fn(jnp.ones((N,), jnp.float32))
    ref = ref_penalty(g_ref)
    assert jnp.allclose(loss, ref, rtol=1e-5, atol=1e-5), (loss, ref)

    # --- Test 2: the loss is trainable (custom VJP path) ---------------------
    def ref_loss(x):
        _, vf = jax.vjp(critic_fn, x)
        (gg,) = vf(jnp.ones((N,), jnp.float32))
        return ref_penalty(gg)

    dx = jax.jit(jax.grad(lambda x: gradient_penalty_loss(x, critic_fn)))(interp)
    dx_ref = jax.grad(ref_loss)(interp)
    assert jnp.allclose(dx, dx_ref, rtol=1e-3, atol=1e-6)

    # --- Test 3: multi-block grid + ragged last block + two parallel chunks --
    g2 = jax.random.normal(k_g1, (2, 3, 24, 48), dtype=jnp.float32)   # D=3456, R=27
    out2 = jax.jit(lambda g: gradient_penalty_from_grad(g, tile_rows=8,
                                                        num_chunks=2))(g2)
    assert jnp.allclose(out2, ref_penalty(g2), rtol=1e-5, atol=1e-5)

    # --- Test 4: phantom trailing block in the last chunk (clamped index_map)
    g3 = jax.random.normal(k_g2, (2, 3, 28, 32), dtype=jnp.float32)   # D=2688, R=21
    out3 = jax.jit(lambda g: gradient_penalty_from_grad(g, tile_rows=8,
                                                        num_chunks=2))(g3)
    assert jnp.allclose(out3, ref_penalty(g3), rtol=1e-5, atol=1e-5)

    # --- Test 5: feature count not a multiple of 128 (pad fallback path) -----
    g4 = jax.random.normal(k_g3, (2, 3, 10, 10), dtype=jnp.float32)   # D=300
    out4 = jax.jit(gradient_penalty_from_grad)(g4)
    assert jnp.allclose(out4, ref_penalty(g4), rtol=1e-5, atol=1e-5)

    # --- Test 6: bf16 gradient, dtype-aware sublane rounding, 2 chunks -------
    g5 = jax.random.normal(k_g1, (2, 8, 32, 32),
                           dtype=jnp.float32).astype(jnp.bfloat16)    # D=8192, R=64
    out5 = jax.jit(lambda g: gradient_penalty_from_grad(g, tile_rows=16,
                                                        num_chunks=2))(g5)
    assert jnp.allclose(out5, ref_penalty(g5.astype(jnp.float32)),
                        rtol=1e-2, atol=1e-2)

    jax.block_until_ready((out2, out3, out4, out5))
    print("KERNEL_OK")
</pallas_src>

<mosaic_0001>
module attributes {stable_mosaic.version = 11 : i64} {
  func.func @_gp_partial_kernel(%arg0: i32, %arg1: i32, %arg2: memref<2x8x128xf32, #tpu.memory_space<vmem>>, %arg3: memref<1x2x128xf32, #tpu.memory_space<vmem>>) attributes {dimension_semantics = [#tpu.dimension_semantics<parallel>, #tpu.dimension_semantics<arbitrary>], iteration_bounds = array<i64: 1, 1>, scalar_prefetch = 0 : i64, scratch_operands = 0 : i64, tpu.core_type = #tpu.core_type<tc>, window_params = [{transform_indices = @transform_0, window_bounds = array<i64: 2, 8, 128>}, {transform_indices = @transform_1, window_bounds = array<i64: 1, 2, 128>}]} {
    %c0_i32 = arith.constant 0 : i32
    %0 = arith.cmpi eq, %arg1, %c0_i32 : i32
    %1 = arith.extui %0 : i1 to i32
    %c0_i32_0 = arith.constant 0 : i32
    %2 = arith.cmpi ne, %1, %c0_i32_0 : i32
    scf.if %2 {
      %cst_9 = arith.constant 0.000000e+00 : f32
      %10 = vector.broadcast %cst_9 : f32 to vector<1x2x128xf32>
      %c0_10 = arith.constant 0 : index
      %c0_11 = arith.constant 0 : index
      %c0_12 = arith.constant 0 : index
      %11 = vector.load %arg3[%c0_10, %c0_11, %c0_12] : memref<1x2x128xf32, #tpu.memory_space<vmem>>, vector<1x2x128xf32>
      tpu.vector_store %arg3[%c0_10, %c0_11, %c0_12], %10 {strides = array<i32>} : memref<1x2x128xf32, #tpu.memory_space<vmem>>, vector<1x2x128xf32>,
    } else {
    }
    %c0 = arith.constant 0 : index
    %c0_1 = arith.constant 0 : index
    %c0_2 = arith.constant 0 : index
    %3 = vector.load %arg2[%c0, %c0_1, %c0_2] : memref<2x8x128xf32, #tpu.memory_space<vmem>>, vector<2x8x128xf32>
    %4 = arith.mulf %3, %3 : vector<2x8x128xf32>
    %c0_3 = arith.constant 0 : index
    %c0_4 = arith.constant 0 : index
    %c0_5 = arith.constant 0 : index
    %5 = vector.load %arg3[%c0_3, %c0_4, %c0_5] : memref<1x2x128xf32, #tpu.memory_space<vmem>>, vector<1x2x128xf32>
    %cst = arith.constant dense<0.000000e+00> : vector<2x128xf32>
    %6 = vector.multi_reduction <add>, %4, %cst [1] : vector<2x8x128xf32> to vector<2x128xf32>
    %7 = vector.shape_cast %6 : vector<2x128xf32> to vector<1x2x128xf32>
    %8 = arith.addf %5, %7 : vector<1x2x128xf32>
    %c0_6 = arith.constant 0 : index
    %c0_7 = arith.constant 0 : index
    %c0_8 = arith.constant 0 : index
    %9 = vector.load %arg3[%c0_6, %c0_7, %c0_8] : memref<1x2x128xf32, #tpu.memory_space<vmem>>, vector<1x2x128xf32>
    tpu.vector_store %arg3[%c0_6, %c0_7, %c0_8], %8 {strides = array<i32>} : memref<1x2x128xf32, #tpu.memory_space<vmem>>, vector<1x2x128xf32>,
    return
  }
  func.func @transform_0(%arg0: i32, %arg1: i32) -> (i32, i32, i32) {
    %c1_i32 = arith.constant 1 : i32
    %0 = arith.muli %arg0, %c1_i32 : i32
    %1 = arith.addi %0, %arg1 : i32
    %c0_i32 = arith.constant 0 : i32
    %c0_i32_0 = arith.constant 0 : i32
    %c0_i32_1 = arith.constant 0 : i32
    return %c0_i32, %1, %c0_i32_0 : i32, i32, i32
  }
  func.func @transform_1(%arg0: i32, %arg1: i32) -> (i32, i32, i32) {
    %c0_i32 = arith.constant 0 : i32
    %c0_i32_0 = arith.constant 0 : i32
    %c0_i32_1 = arith.constant 0 : i32
    return %arg0, %c0_i32, %c0_i32_0 : i32, i32, i32
  }
}

</mosaic_0001>

<llo_original>
// kernel: _lambda_.1
$region0: #{_lambda_.1}
  #allocation0 [shape = 'u32[]', space=smem, size = 0x4, offset = 0x4, fixed_abs, tag = 'smem constant byte address 0x4 - core index']
  #allocation1 [shape = 'u32[72,128]{1,0:T(1,128)}', space=vmem, size = 0x9000, scoped, tag = 'internal scratch']
  %s0 = inlined_call_operand.vmem [shape: f32[2,8,128], index: 0, kind: input, shape index: {}]
  %s1 = inlined_call_operand.vmem [shape: f32[1,2,128], index: 1, kind: output, shape index: {}]
  %s2 = sld [smem:[#allocation0]]
  $region18: #{_lambda_.1} parent=0
    _
  %s4 = ssub.s32 1, %s2
  %s5 = scalar_select 0, %s4, %s2
  // Predicated region
  $region2: #{_lambda_.1} parent=0 // pred_check
    _
  $region3: #{_lambda_.1} parent=0 // pred_check_branch
    %7 = sbr.rel (0) target = $region5
  $region4: #{_lambda_.1} parent=0 // pred_region
    %s8 = sadd.s32 0, 0
    %p9 = scmp.lt.s32.totalorder %s8, 0
    %s10 = scalar_select %p9, %s8, 0
    %s11 = smul.addr %s10, 8
    %s12 = scalar_lea.vmem %s0, %s11
    %s13 = sadd.s32 0, 0
  $region5: #{_lambda_.1} parent=0 // pred_fallthru
    _
  %s14 = sadd.s32 0, 0
  %p15 = scmp.lt.s32.totalorder %s14, 0
  %s16 = scalar_select %p15, %s14, 0
  %s17 = smul.addr %s16, 8
  %s18 = scalar_lea.vmem %s0, %s17
  %s19 = sadd.s32 0, 0
  %p20 = scmp.lt.s32.totalorder %s19, 0
  %s21 = scalar_select %p20, %s19, 0
  %s22 = smul.addr %s21, 8
  %s23 = scalar_lea.vmem %s0, %s22
  %s24 = sadd.s32 0, 0
  %p25 = scmp.eq.s32.totalorder 0, 0
  // Predicated region
  $region6: #{_lambda_.1} parent=0 // pred_check
    %p26 = pneg %p25
  $region7: #{_lambda_.1} parent=0 // pred_check_branch
    %28 = sbr.rel (%p26) target = $region9
  $region8: #{_lambda_.1} parent=0 // pred_region
    %29 = vst [vmem:[%s1] sm:$0x3] 0.0
  $region9: #{_lambda_.1} parent=0 // pred_fallthru
    _
  %v30 = vld [vmem:[%s23] sm:$0xff]
  %v31 = vld [vmem:[%s23 + $0x8] sm:$0xff]
  %v32 = vmul.f32 %v30, %v30
  %v33 = vmul.f32 %v31, %v31
  %v34 = vld [vmem:[%s1] sm:$0x3]
  %v35 = vrot.slane %v32, 4
  %v36 = vadd.f32 %v32, %v35
  %v37 = vrot.slane %v36, 2
  %v38 = vadd.f32 %v36, %v37
  %v39 = vrot.slane %v38, 1
  %v40 = vadd.f32 %v38, %v39
  %v41 = vrot.slane %v33, 4
  %v42 = vadd.f32 %v33, %v41
  %v43 = vrot.slane %v42, 2
  %v44 = vadd.f32 %v42, %v43
  %v45 = vrot.slane %v44, 1
  %v46 = vadd.f32 %v44, %v45
  %vm49 = vcmask 1041409
  %v50 = vsel %vm49, %v46, %v40
  %v52 = vadd.f32 %v34, %v50
  %53 = vst [vmem:[%s1] sm:$0x3] %v52
  // Predicated region
  $region10: #{_lambda_.1} parent=0 // pred_check
    _
  $region11: #{_lambda_.1} parent=0 // pred_check_branch
    %55 = sbr.rel (0) target = $region13
  $region12: #{_lambda_.1} parent=0 // pred_region
    _
  $region13: #{_lambda_.1} parent=0 // pred_fallthru
    _
  // Predicated region
  $region14: #{_lambda_.1} parent=0 // pred_check
    _
  $region15: #{_lambda_.1} parent=0 // pred_check_branch
    %57 = sbr.rel (0) target = $region17
  $region16: #{_lambda_.1} parent=0 // pred_region
    _
  $region17: #{_lambda_.1} parent=0 // pred_fallthru
    _

</llo_original>
